<compile_context>
chip_gen: v6e
topology: v6e:2x2x1
jax: 0.10.0
libtpu: 0.0.40
codegen_flags: <defaults>
</compile_context>

<pallas_src>
import jax
import jax.numpy as jnp
from jax.experimental import pallas as pl
from jax.experimental.pallas import tpu as pltpu


def _round_up(x, m):
    return (x + m - 1) // m * m


def _vae_forward_kernel(x_ref, eps_ref,
                        we1_ref, be1_ref,
                        we2_ref, be2_ref,
                        wms_ref, bms_ref,
                        wd1x_ref, wd1z_ref, bd1_ref,
                        wd2_ref, bd2_ref,
                        wd3_ref, bd3_ref,
                        out_ref):
    """One batch tile of the full VAE forward pass, fused in VMEM.

    MXU matmuls use the weights' dtype (bf16) with f32 accumulation; the
    epilogue (bias, ReLU, clamp, exp, tanh, reparameterization) runs in f32.
    The three results are packed lane-dense into out_ref = [u | mean | std | 0].
    """
    f32 = jnp.float32
    mm = we1_ref.dtype                 # matmul operand dtype (bf16 by default)
    lat = eps_ref.shape[1]             # 2 * action_dim

    x = x_ref[...]                     # obs || act, already cast in wrapper
    eps = eps_ref[...].astype(f32)

    # ---------------- encoder: relu(e1(cat[obs, act])) -> relu(e2) ----------
    h = jnp.dot(x, we1_ref[...], preferred_element_type=f32) + be1_ref[...]
    h = jnp.maximum(h, 0.0)
    h = jnp.maximum(
        jnp.dot(h.astype(mm), we2_ref[...], preferred_element_type=f32)
        + be2_ref[...], 0.0)

    # Fused mean / log_std head: one (hidden, 2*lat) matmul, split the result.
    ms = (jnp.dot(h.astype(mm), wms_ref[...], preferred_element_type=f32)
          + bms_ref[...])
    mean = ms[:, :lat]
    log_std = jnp.clip(ms[:, lat:], -4.0, 15.0)
    std = jnp.exp(log_std)

    # reparameterization: z = mean + std * eps  (eps = randn_like, from host)
    z = mean + std * eps

    # ---------------- decoder: tanh(d3(relu(d2(relu(d1(cat[obs, z])))))) ----
    # x @ wd1x == obs @ wd1[:obs_dim]  (action rows of wd1x are zero),
    # so the same x stream feeds d1 with no in-kernel slicing/concat.
    a = (jnp.dot(x, wd1x_ref[...], preferred_element_type=f32)
         + jnp.dot(z.astype(mm), wd1z_ref[...], preferred_element_type=f32)
         + bd1_ref[...])
    a = jnp.maximum(a, 0.0)
    a = jnp.maximum(
        jnp.dot(a.astype(mm), wd2_ref[...], preferred_element_type=f32)
        + bd2_ref[...], 0.0)
    u = jnp.tanh(
        jnp.dot(a.astype(mm), wd3_ref[...], preferred_element_type=f32)
        + bd3_ref[...])

    # Lane-dense packed output: [u | mean | std | zero-pad] -> full-width store.
    packed = jnp.concatenate([u, mean, std], axis=1)
    pad = out_ref.shape[1] - packed.shape[1]
    if pad > 0:
        packed = jnp.concatenate(
            [packed, jnp.zeros((packed.shape[0], pad), f32)], axis=1)
    out_ref[...] = packed.astype(out_ref.dtype)


def vae_forward(obs, act, eps, params, *, batch_tile=1024,
                matmul_dtype=jnp.bfloat16):
    """Fused VAE forward.

    obs: [B, obs+goal] f32, act: [B, action] f32,
    eps: [B, 2*action] f32 standard-normal noise (torch.randn_like equivalent).
    Returns (u [B, action], mean [B, 2*action], std [B, 2*action]) in f32.
    """
    B, obs_dim = obs.shape
    act_dim = act.shape[1]
    lat_dim = 2 * act_dim
    in_dim = obs_dim + act_dim
    hidden = params["w_e2"].shape[0]

    # Packed output width: u (act) + mean (lat) + std (lat), lane-padded to 128.
    out_lanes = max(128, _round_up(act_dim + 2 * lat_dim, 128))

    # Tile selection: big tiles to amortize grid-step overhead, multiple of 16
    # (bf16 sublane packing); for large batches keep >= 2 grid steps so a
    # 2-TensorCore chip (v7x) can shard batch tiles across cores.
    tile = max(16, min(int(batch_tile), _round_up(B, 16)))
    tile = _round_up(tile, 16)
    if B >= 512:
        tile = min(tile, max(256, _round_up(_round_up(B, 16) // 2, 256)))
    B_pad = _round_up(B, tile)

    # obs||act concatenated once here (plain XLA concat) -> single e1 matmul.
    x = jnp.concatenate([obs, act], axis=1)
    if B_pad != B:
        pad_rows = ((0, B_pad - B), (0, 0))
        x = jnp.pad(x, pad_rows)
        eps = jnp.pad(eps, pad_rows)

    x_m = x.astype(matmul_dtype)
    wcast = lambda w: w.astype(matmul_dtype)
    row = lambda b: b.reshape(1, -1).astype(jnp.float32)

    # d1 weight: obs-part rows kept, action-part rows zeroed so x feeds d1
    # directly; z-part stays a separate matmul (z is produced in-kernel).
    w_d1 = params["w_d1"]
    wd1_obs, wd1_z = w_d1[:obs_dim], w_d1[obs_dim:]
    wd1_x = jnp.concatenate(
        [wd1_obs, jnp.zeros((act_dim, hidden), wd1_obs.dtype)], axis=0)

    # Fused mean / log_std head.
    w_ms = jnp.concatenate([params["w_mean"], params["w_log_std"]], axis=1)
    b_ms = jnp.concatenate([params["b_mean"], params["b_log_std"]])

    weight_args = (
        wcast(params["w_e1"]), row(params["b_e1"]),
        wcast(params["w_e2"]), row(params["b_e2"]),
        wcast(w_ms), row(b_ms),
        wcast(wd1_x), wcast(wd1_z), row(params["b_d1"]),
        wcast(params["w_d2"]), row(params["b_d2"]),
        wcast(params["w_d3"]), row(params["b_d3"]),
    )

    # Per-row tensors are blocked over batch; weights/biases live whole in
    # VMEM (memory_space spec => constants, no per-step double buffering).
    def batched(feat):
        return pl.BlockSpec((tile, feat), lambda i: (i, 0))

    vmem_const = pl.BlockSpec(memory_space=pltpu.MemorySpace.VMEM)

    out = pl.pallas_call(
        _vae_forward_kernel,
        out_shape=jax.ShapeDtypeStruct((B_pad, out_lanes), jnp.float32),
        grid_spec=pltpu.PrefetchScalarGridSpec(
            num_scalar_prefetch=0,
            grid=(B_pad // tile,),
            in_specs=[batched(in_dim), batched(lat_dim)]
                     + [vmem_const] * len(weight_args),
            out_specs=pl.BlockSpec((tile, out_lanes), lambda i: (i, 0)),
        ),
        compiler_params=pltpu.CompilerParams(
            dimension_semantics=("parallel",),
            vmem_limit_bytes=32 << 20),
    )(x_m, eps, *weight_args)

    u = out[:B, :act_dim]
    mean = out[:B, act_dim:act_dim + lat_dim]
    std = out[:B, act_dim + lat_dim:act_dim + 2 * lat_dim]
    return u, mean, std


# ------------------------- init & pure-JAX reference -------------------------

def _linear_init(key, fan_in, fan_out):
    # Matches torch.nn.Linear default: U(-1/sqrt(fan_in), 1/sqrt(fan_in)).
    kw, kb = jax.random.split(key)
    bound = float(fan_in) ** -0.5
    w = jax.random.uniform(kw, (fan_in, fan_out), jnp.float32, -bound, bound)
    b = jax.random.uniform(kb, (fan_out,), jnp.float32, -bound, bound)
    return w, b


def init_params(key, env_params, hidden_size=256):
    obs_goal = env_params["obs"] + env_params["goal"]
    a = env_params["action"]
    k = jax.random.split(key, 7)
    w_e1, b_e1 = _linear_init(k[0], obs_goal + a, hidden_size)
    w_e2, b_e2 = _linear_init(k[1], hidden_size, hidden_size)
    w_mu, b_mu = _linear_init(k[2], hidden_size, 2 * a)
    w_ls, b_ls = _linear_init(k[3], hidden_size, 2 * a)
    w_d1, b_d1 = _linear_init(k[4], obs_goal + 2 * a, hidden_size)
    w_d2, b_d2 = _linear_init(k[5], hidden_size, hidden_size)
    w_d3, b_d3 = _linear_init(k[6], hidden_size, a)
    return dict(w_e1=w_e1, b_e1=b_e1, w_e2=w_e2, b_e2=b_e2,
                w_mean=w_mu, b_mean=b_mu, w_log_std=w_ls, b_log_std=b_ls,
                w_d1=w_d1, b_d1=b_d1, w_d2=w_d2, b_d2=b_d2,
                w_d3=w_d3, b_d3=b_d3)


def vae_forward_ref(obs, act, eps, params, matmul_dtype=jnp.bfloat16):
    # Pure-JAX reference with the same bf16-operand / f32-accumulate numerics.
    mm = matmul_dtype

    def lin(x, w, b):
        return jnp.dot(x.astype(mm), w.astype(mm),
                       preferred_element_type=jnp.float32) + b

    x = jnp.concatenate([obs, act], axis=1)
    h = jax.nn.relu(lin(x, params["w_e1"], params["b_e1"]))
    h = jax.nn.relu(lin(h, params["w_e2"], params["b_e2"]))
    mean = lin(h, params["w_mean"], params["b_mean"])
    log_std = jnp.clip(lin(h, params["w_log_std"], params["b_log_std"]), -4.0, 15.0)
    std = jnp.exp(log_std)
    z = mean + std * eps
    xd = jnp.concatenate([obs, z], axis=1)
    a = jax.nn.relu(lin(xd, params["w_d1"], params["b_d1"]))
    a = jax.nn.relu(lin(a, params["w_d2"], params["b_d2"]))
    u = jnp.tanh(lin(a, params["w_d3"], params["b_d3"]))
    return u, mean, std


if __name__ == "__main__":
    env_params = {"obs": 10, "goal": 5, "action": 4}
    batch = 2
    hidden = 256  # module default

    key = jax.random.PRNGKey(0)
    k_obs, k_act, k_eps, k_par = jax.random.split(key, 4)
    obs = jax.random.normal(
        k_obs, (batch, env_params["obs"] + env_params["goal"]), jnp.float32)
    act = jax.random.normal(k_act, (batch, env_params["action"]), jnp.float32)
    eps = jax.random.normal(k_eps, (batch, 2 * env_params["action"]), jnp.float32)
    params = init_params(k_par, env_params, hidden)

    u, mean, std = vae_forward(obs, act, eps, params)
    u = jax.block_until_ready(u)
    mean = jax.block_until_ready(mean)
    std = jax.block_until_ready(std)

    u_ref, mean_ref, std_ref = vae_forward_ref(obs, act, eps, params)

    assert u.shape == (batch, env_params["action"])
    assert mean.shape == (batch, 2 * env_params["action"])
    assert std.shape == (batch, 2 * env_params["action"])
    # bf16 matmul operands (f32 accumulation) match the same-dtype reference.
    assert jnp.allclose(u, u_ref, atol=5e-3, rtol=5e-3)
    assert jnp.allclose(mean, mean_ref, atol=5e-3, rtol=5e-3)
    assert jnp.allclose(std, std_ref, atol=5e-3, rtol=5e-3)

    # TODO(synk): decode_multiple (num_decode-way batched decode) is not fused;
    # it can reuse the decoder half of this kernel with a flattened batch.
    print("KERNEL_OK")
</pallas_src>

<mosaic_0001>
module attributes {stable_mosaic.version = 11 : i64} {
  func.func @_vae_forward_kernel(%arg0: i32, %arg1: memref<16x19xbf16, #tpu.memory_space<vmem>>, %arg2: memref<16x8xf32, #tpu.memory_space<vmem>>, %arg3: memref<19x256xbf16, #tpu.memory_space<vmem>>, %arg4: memref<1x256xf32, #tpu.memory_space<vmem>>, %arg5: memref<256x256xbf16, #tpu.memory_space<vmem>>, %arg6: memref<1x256xf32, #tpu.memory_space<vmem>>, %arg7: memref<256x16xbf16, #tpu.memory_space<vmem>>, %arg8: memref<1x16xf32, #tpu.memory_space<vmem>>, %arg9: memref<19x256xbf16, #tpu.memory_space<vmem>>, %arg10: memref<8x256xbf16, #tpu.memory_space<vmem>>, %arg11: memref<1x256xf32, #tpu.memory_space<vmem>>, %arg12: memref<256x256xbf16, #tpu.memory_space<vmem>>, %arg13: memref<1x256xf32, #tpu.memory_space<vmem>>, %arg14: memref<256x4xbf16, #tpu.memory_space<vmem>>, %arg15: memref<1x4xf32, #tpu.memory_space<vmem>>, %arg16: memref<16x128xf32, #tpu.memory_space<vmem>>) attributes {dimension_semantics = [#tpu.dimension_semantics<parallel>], iteration_bounds = array<i64: 1>, scalar_prefetch = 0 : i64, scratch_operands = 0 : i64, tpu.core_type = #tpu.core_type<tc>, window_params = [{transform_indices = @transform_0, window_bounds = array<i64: 16, 19>}, {transform_indices = @transform_1, window_bounds = array<i64: 16, 8>}, {pipeline_mode = #tpu.pipeline_mode<synchronous>, transform_indices = @transform_2, window_bounds = array<i64: 19, 256>}, {pipeline_mode = #tpu.pipeline_mode<synchronous>, transform_indices = @transform_3, window_bounds = array<i64: 1, 256>}, {pipeline_mode = #tpu.pipeline_mode<synchronous>, transform_indices = @transform_4, window_bounds = array<i64: 256, 256>}, {pipeline_mode = #tpu.pipeline_mode<synchronous>, transform_indices = @transform_5, window_bounds = array<i64: 1, 256>}, {pipeline_mode = #tpu.pipeline_mode<synchronous>, transform_indices = @transform_6, window_bounds = array<i64: 256, 16>}, {pipeline_mode = #tpu.pipeline_mode<synchronous>, transform_indices = @transform_7, window_bounds = array<i64: 1, 16>}, {pipeline_mode = #tpu.pipeline_mode<synchronous>, transform_indices = @transform_8, window_bounds = array<i64: 19, 256>}, {pipeline_mode = #tpu.pipeline_mode<synchronous>, transform_indices = @transform_9, window_bounds = array<i64: 8, 256>}, {pipeline_mode = #tpu.pipeline_mode<synchronous>, transform_indices = @transform_10, window_bounds = array<i64: 1, 256>}, {pipeline_mode = #tpu.pipeline_mode<synchronous>, transform_indices = @transform_11, window_bounds = array<i64: 256, 256>}, {pipeline_mode = #tpu.pipeline_mode<synchronous>, transform_indices = @transform_12, window_bounds = array<i64: 1, 256>}, {pipeline_mode = #tpu.pipeline_mode<synchronous>, transform_indices = @transform_13, window_bounds = array<i64: 256, 4>}, {pipeline_mode = #tpu.pipeline_mode<synchronous>, transform_indices = @transform_14, window_bounds = array<i64: 1, 4>}, {transform_indices = @transform_15, window_bounds = array<i64: 16, 128>}]} {
    %c0 = arith.constant 0 : index
    %c0_0 = arith.constant 0 : index
    %0 = vector.load %arg1[%c0, %c0_0] : memref<16x19xbf16, #tpu.memory_space<vmem>>, vector<16x19xbf16>
    %c0_1 = arith.constant 0 : index
    %c0_2 = arith.constant 0 : index
    %1 = vector.load %arg2[%c0_1, %c0_2] : memref<16x8xf32, #tpu.memory_space<vmem>>, vector<16x8xf32>
    %c0_3 = arith.constant 0 : index
    %c0_4 = arith.constant 0 : index
    %2 = vector.load %arg3[%c0_3, %c0_4] : memref<19x256xbf16, #tpu.memory_space<vmem>>, vector<19x256xbf16>
    %cst = arith.constant dense<0.000000e+00> : vector<16x256xf32>
    %3 = tpu.matmul %0, %2, %cst {dimension_numbers = #tpu.dot_dimension_numbers<[1], [0], [0], [1], [0, 0, 1, 1], [], []>} : vector<16x19xbf16>, vector<19x256xbf16>, vector<16x256xf32> -> vector<16x256xf32>
    %c0_5 = arith.constant 0 : index
    %c0_6 = arith.constant 0 : index
    %4 = vector.load %arg4[%c0_5, %c0_6] : memref<1x256xf32, #tpu.memory_space<vmem>>, vector<1x256xf32>
    %5 = vector.broadcast %4 : vector<1x256xf32> to vector<16x256xf32>
    %6 = arith.addf %3, %5 : vector<16x256xf32>
    %cst_7 = arith.constant 0.000000e+00 : f32
    %7 = vector.broadcast %cst_7 : f32 to vector<16x256xf32>
    %8 = arith.maximumf %6, %7 : vector<16x256xf32>
    %9 = arith.truncf %8 : vector<16x256xf32> to vector<16x256xbf16>
    %c0_8 = arith.constant 0 : index
    %c0_9 = arith.constant 0 : index
    %10 = vector.load %arg5[%c0_8, %c0_9] : memref<256x256xbf16, #tpu.memory_space<vmem>>, vector<256x256xbf16>
    %cst_10 = arith.constant dense<0.000000e+00> : vector<16x256xf32>
    %11 = tpu.matmul %9, %10, %cst_10 {dimension_numbers = #tpu.dot_dimension_numbers<[1], [0], [0], [1], [0, 0, 1, 1], [], []>} : vector<16x256xbf16>, vector<256x256xbf16>, vector<16x256xf32> -> vector<16x256xf32>
    %c0_11 = arith.constant 0 : index
    %c0_12 = arith.constant 0 : index
    %12 = vector.load %arg6[%c0_11, %c0_12] : memref<1x256xf32, #tpu.memory_space<vmem>>, vector<1x256xf32>
    %13 = vector.broadcast %12 : vector<1x256xf32> to vector<16x256xf32>
    %14 = arith.addf %11, %13 : vector<16x256xf32>
    %cst_13 = arith.constant 0.000000e+00 : f32
    %15 = vector.broadcast %cst_13 : f32 to vector<16x256xf32>
    %16 = arith.maximumf %14, %15 : vector<16x256xf32>
    %17 = arith.truncf %16 : vector<16x256xf32> to vector<16x256xbf16>
    %c0_14 = arith.constant 0 : index
    %c0_15 = arith.constant 0 : index
    %18 = vector.load %arg7[%c0_14, %c0_15] : memref<256x16xbf16, #tpu.memory_space<vmem>>, vector<256x16xbf16>
    %cst_16 = arith.constant dense<0.000000e+00> : vector<16x16xf32>
    %19 = tpu.matmul %17, %18, %cst_16 {dimension_numbers = #tpu.dot_dimension_numbers<[1], [0], [0], [1], [0, 0, 1, 1], [], []>} : vector<16x256xbf16>, vector<256x16xbf16>, vector<16x16xf32> -> vector<16x16xf32>
    %c0_17 = arith.constant 0 : index
    %c0_18 = arith.constant 0 : index
    %20 = vector.load %arg8[%c0_17, %c0_18] : memref<1x16xf32, #tpu.memory_space<vmem>>, vector<1x16xf32>
    %21 = vector.broadcast %20 : vector<1x16xf32> to vector<16x16xf32>
    %22 = arith.addf %19, %21 : vector<16x16xf32>
    %23 = vector.extract_strided_slice %22 {offsets = [0, 0], sizes = [16, 8], strides = [1, 1]} : vector<16x16xf32> to vector<16x8xf32>
    %24 = vector.extract_strided_slice %22 {offsets = [0, 8], sizes = [16, 8], strides = [1, 1]} : vector<16x16xf32> to vector<16x8xf32>
    %cst_19 = arith.constant -4.000000e+00 : f32
    %cst_20 = arith.constant 1.500000e+01 : f32
    %25 = vector.broadcast %cst_19 : f32 to vector<16x8xf32>
    %26 = arith.maximumf %25, %24 : vector<16x8xf32>
    %27 = vector.broadcast %cst_20 : f32 to vector<16x8xf32>
    %28 = arith.minimumf %27, %26 : vector<16x8xf32>
    %29 = math.exp %28 : vector<16x8xf32>
    %30 = arith.mulf %29, %1 : vector<16x8xf32>
    %31 = arith.addf %23, %30 : vector<16x8xf32>
    %c0_21 = arith.constant 0 : index
    %c0_22 = arith.constant 0 : index
    %32 = vector.load %arg9[%c0_21, %c0_22] : memref<19x256xbf16, #tpu.memory_space<vmem>>, vector<19x256xbf16>
    %cst_23 = arith.constant dense<0.000000e+00> : vector<16x256xf32>
    %33 = tpu.matmul %0, %32, %cst_23 {dimension_numbers = #tpu.dot_dimension_numbers<[1], [0], [0], [1], [0, 0, 1, 1], [], []>} : vector<16x19xbf16>, vector<19x256xbf16>, vector<16x256xf32> -> vector<16x256xf32>
    %34 = arith.truncf %31 : vector<16x8xf32> to vector<16x8xbf16>
    %c0_24 = arith.constant 0 : index
    %c0_25 = arith.constant 0 : index
    %35 = vector.load %arg10[%c0_24, %c0_25] : memref<8x256xbf16, #tpu.memory_space<vmem>>, vector<8x256xbf16>
    %cst_26 = arith.constant dense<0.000000e+00> : vector<16x256xf32>
    %36 = tpu.matmul %34, %35, %cst_26 {dimension_numbers = #tpu.dot_dimension_numbers<[1], [0], [0], [1], [0, 0, 1, 1], [], []>} : vector<16x8xbf16>, vector<8x256xbf16>, vector<16x256xf32> -> vector<16x256xf32>
    %37 = arith.addf %33, %36 : vector<16x256xf32>
    %c0_27 = arith.constant 0 : index
    %c0_28 = arith.constant 0 : index
    %38 = vector.load %arg11[%c0_27, %c0_28] : memref<1x256xf32, #tpu.memory_space<vmem>>, vector<1x256xf32>
    %39 = vector.broadcast %38 : vector<1x256xf32> to vector<16x256xf32>
    %40 = arith.addf %37, %39 : vector<16x256xf32>
    %cst_29 = arith.constant 0.000000e+00 : f32
    %41 = vector.broadcast %cst_29 : f32 to vector<16x256xf32>
    %42 = arith.maximumf %40, %41 : vector<16x256xf32>
    %43 = arith.truncf %42 : vector<16x256xf32> to vector<16x256xbf16>
    %c0_30 = arith.constant 0 : index
    %c0_31 = arith.constant 0 : index
    %44 = vector.load %arg12[%c0_30, %c0_31] : memref<256x256xbf16, #tpu.memory_space<vmem>>, vector<256x256xbf16>
    %cst_32 = arith.constant dense<0.000000e+00> : vector<16x256xf32>
    %45 = tpu.matmul %43, %44, %cst_32 {dimension_numbers = #tpu.dot_dimension_numbers<[1], [0], [0], [1], [0, 0, 1, 1], [], []>} : vector<16x256xbf16>, vector<256x256xbf16>, vector<16x256xf32> -> vector<16x256xf32>
    %c0_33 = arith.constant 0 : index
    %c0_34 = arith.constant 0 : index
    %46 = vector.load %arg13[%c0_33, %c0_34] : memref<1x256xf32, #tpu.memory_space<vmem>>, vector<1x256xf32>
    %47 = vector.broadcast %46 : vector<1x256xf32> to vector<16x256xf32>
    %48 = arith.addf %45, %47 : vector<16x256xf32>
    %cst_35 = arith.constant 0.000000e+00 : f32
    %49 = vector.broadcast %cst_35 : f32 to vector<16x256xf32>
    %50 = arith.maximumf %48, %49 : vector<16x256xf32>
    %51 = arith.truncf %50 : vector<16x256xf32> to vector<16x256xbf16>
    %c0_36 = arith.constant 0 : index
    %c0_37 = arith.constant 0 : index
    %52 = vector.load %arg14[%c0_36, %c0_37] : memref<256x4xbf16, #tpu.memory_space<vmem>>, vector<256x4xbf16>
    %cst_38 = arith.constant dense<0.000000e+00> : vector<16x4xf32>
    %53 = tpu.matmul %51, %52, %cst_38 {dimension_numbers = #tpu.dot_dimension_numbers<[1], [0], [0], [1], [0, 0, 1, 1], [], []>} : vector<16x256xbf16>, vector<256x4xbf16>, vector<16x4xf32> -> vector<16x4xf32>
    %c0_39 = arith.constant 0 : index
    %c0_40 = arith.constant 0 : index
    %54 = vector.load %arg15[%c0_39, %c0_40] : memref<1x4xf32, #tpu.memory_space<vmem>>, vector<1x4xf32>
    %55 = vector.broadcast %54 : vector<1x4xf32> to vector<16x4xf32>
    %56 = arith.addf %53, %55 : vector<16x4xf32>
    %57 = math.tanh %56 : vector<16x4xf32>
    %58 = tpu.concatenate %57, %23, %29 in 1 : vector<16x4xf32>, vector<16x8xf32>, vector<16x8xf32> -> vector<16x20xf32>
    %cst_41 = arith.constant 0.000000e+00 : f32
    %59 = vector.broadcast %cst_41 : f32 to vector<16x108xf32>
    %60 = tpu.concatenate %58, %59 in 1 : vector<16x20xf32>, vector<16x108xf32> -> vector<16x128xf32>
    %c0_42 = arith.constant 0 : index
    %c0_43 = arith.constant 0 : index
    %61 = vector.load %arg16[%c0_42, %c0_43] : memref<16x128xf32, #tpu.memory_space<vmem>>, vector<16x128xf32>
    tpu.vector_store %arg16[%c0_42, %c0_43], %60 {strides = array<i32>} : memref<16x128xf32, #tpu.memory_space<vmem>>, vector<16x128xf32>,
    return
  }
  func.func @transform_0(%arg0: i32) -> (i32, i32) {
    %c0_i32 = arith.constant 0 : i32
    %c0_i32_0 = arith.constant 0 : i32
    return %arg0, %c0_i32 : i32, i32
  }
  func.func @transform_1(%arg0: i32) -> (i32, i32) {
    %c0_i32 = arith.constant 0 : i32
    %c0_i32_0 = arith.constant 0 : i32
    return %arg0, %c0_i32 : i32, i32
  }
  func.func @transform_2(%arg0: i32) -> (i32, i32) {
    %c0_i32 = arith.constant 0 : i32
    %c0_i32_0 = arith.constant 0 : i32
    %c0_i32_1 = arith.constant 0 : i32
    return %c0_i32, %c0_i32_0 : i32, i32
  }
  func.func @transform_3(%arg0: i32) -> (i32, i32) {
    %c0_i32 = arith.constant 0 : i32
    %c0_i32_0 = arith.constant 0 : i32
    %c0_i32_1 = arith.constant 0 : i32
    return %c0_i32, %c0_i32_0 : i32, i32
  }
  func.func @transform_4(%arg0: i32) -> (i32, i32) {
    %c0_i32 = arith.constant 0 : i32
    %c0_i32_0 = arith.constant 0 : i32
    %c0_i32_1 = arith.constant 0 : i32
    return %c0_i32, %c0_i32_0 : i32, i32
  }
  func.func @transform_5(%arg0: i32) -> (i32, i32) {
    %c0_i32 = arith.constant 0 : i32
    %c0_i32_0 = arith.constant 0 : i32
    %c0_i32_1 = arith.constant 0 : i32
    return %c0_i32, %c0_i32_0 : i32, i32
  }
  func.func @transform_6(%arg0: i32) -> (i32, i32) {
    %c0_i32 = arith.constant 0 : i32
    %c0_i32_0 = arith.constant 0 : i32
    %c0_i32_1 = arith.constant 0 : i32
    return %c0_i32, %c0_i32_0 : i32, i32
  }
  func.func @transform_7(%arg0: i32) -> (i32, i32) {
    %c0_i32 = arith.constant 0 : i32
    %c0_i32_0 = arith.constant 0 : i32
    %c0_i32_1 = arith.constant 0 : i32
    return %c0_i32, %c0_i32_0 : i32, i32
  }
  func.func @transform_8(%arg0: i32) -> (i32, i32) {
    %c0_i32 = arith.constant 0 : i32
    %c0_i32_0 = arith.constant 0 : i32
    %c0_i32_1 = arith.constant 0 : i32
    return %c0_i32, %c0_i32_0 : i32, i32
  }
  func.func @transform_9(%arg0: i32) -> (i32, i32) {
    %c0_i32 = arith.constant 0 : i32
    %c0_i32_0 = arith.constant 0 : i32
    %c0_i32_1 = arith.constant 0 : i32
    return %c0_i32, %c0_i32_0 : i32, i32
  }
  func.func @transform_10(%arg0: i32) -> (i32, i32) {
    %c0_i32 = arith.constant 0 : i32
    %c0_i32_0 = arith.constant 0 : i32
    %c0_i32_1 = arith.constant 0 : i32
    return %c0_i32, %c0_i32_0 : i32, i32
  }
  func.func @transform_11(%arg0: i32) -> (i32, i32) {
    %c0_i32 = arith.constant 0 : i32
    %c0_i32_0 = arith.constant 0 : i32
    %c0_i32_1 = arith.constant 0 : i32
    return %c0_i32, %c0_i32_0 : i32, i32
  }
  func.func @transform_12(%arg0: i32) -> (i32, i32) {
    %c0_i32 = arith.constant 0 : i32
    %c0_i32_0 = arith.constant 0 : i32
    %c0_i32_1 = arith.constant 0 : i32
    return %c0_i32, %c0_i32_0 : i32, i32
  }
  func.func @transform_13(%arg0: i32) -> (i32, i32) {
    %c0_i32 = arith.constant 0 : i32
    %c0_i32_0 = arith.constant 0 : i32
    %c0_i32_1 = arith.constant 0 : i32
    return %c0_i32, %c0_i32_0 : i32, i32
  }
  func.func @transform_14(%arg0: i32) -> (i32, i32) {
    %c0_i32 = arith.constant 0 : i32
    %c0_i32_0 = arith.constant 0 : i32
    %c0_i32_1 = arith.constant 0 : i32
    return %c0_i32, %c0_i32_0 : i32, i32
  }
  func.func @transform_15(%arg0: i32) -> (i32, i32) {
    %c0_i32 = arith.constant 0 : i32
    %c0_i32_0 = arith.constant 0 : i32
    return %arg0, %c0_i32 : i32, i32
  }
}

</mosaic_0001>

<llo_original>
// kernel: tpu_custom_call.1
$region0: #{tpu_custom_call.1}
  #allocation0 [shape = 'u32[]', space=smem, size = 0x4, offset = 0x4, fixed_abs, tag = 'smem constant byte address 0x4 - core index']
  #allocation1 [shape = 'u32[144,128]{1,0:T(1,128)}', space=vmem, size = 0x12000, scoped, tag = 'internal scratch']
  %s0 = inlined_call_operand.hbm [shape: bf16[16,19], index: 0, kind: input, shape index: {}]
  %s1 = inlined_call_operand.vmem [shape: f32[16,8], index: 1, kind: input, shape index: {}]
  %s2 = inlined_call_operand.vmem [shape: bf16[19,256], index: 2, kind: input, shape index: {}]
  %s3 = inlined_call_operand.vmem [shape: f32[1,256], index: 3, kind: input, shape index: {}]
  %s4 = inlined_call_operand.vmem [shape: bf16[256,256], index: 4, kind: input, shape index: {}]
  %s5 = inlined_call_operand.hbm [shape: f32[1,256], index: 5, kind: input, shape index: {}]
  %s6 = inlined_call_operand.vmem [shape: bf16[256,16], index: 6, kind: input, shape index: {}]
  %s7 = inlined_call_operand.hbm [shape: f32[1,16], index: 7, kind: input, shape index: {}]
  %s8 = inlined_call_operand.vmem [shape: bf16[19,256], index: 8, kind: input, shape index: {}]
  %s9 = inlined_call_operand.vmem [shape: bf16[8,256], index: 9, kind: input, shape index: {}]
  %s10 = inlined_call_operand.hbm [shape: f32[1,256], index: 10, kind: input, shape index: {}]
  %s11 = inlined_call_operand.hbm [shape: bf16[256,256], index: 11, kind: input, shape index: {}]
  %s12 = inlined_call_operand.vmem [shape: f32[1,256], index: 12, kind: input, shape index: {}]
  %s13 = inlined_call_operand.vmem [shape: bf16[256,4], index: 13, kind: input, shape index: {}]
  %s14 = inlined_call_operand.vmem [shape: f32[1,4], index: 14, kind: input, shape index: {}]
  %s15 = inlined_call_operand.hbm [shape: f32[16,128], index: 15, kind: output, shape index: {}]
  %s16 = sld [smem:[#allocation0]]
  $region90: #{tpu_custom_call.1} parent=0
    _
  %s18 = ssub.s32 1, %s16
  %s19 = scalar_select 0, %s18, %s16
  $region1: #{tpu_custom_call.1} parent=0
    #allocation2 [shape = 'u8[4096]{0}', space=vmem, size = 0x1000, scoped, tag = 'input window, operand 0, single buffered']
    #allocation3 [shape = 's32[1]{0}', space=sflag, size = 0x4, scoped, tag = 'scoped memory for tpu_custom_call.1']
    #allocation4 [shape = 's32[1]{0}', space=sflag, size = 0x4, scoped, tag = 'scoped memory for tpu_custom_call.1']
    #allocation5 [shape = 'u8[1024]{0}', space=vmem, size = 0x400, scoped, tag = 'input window, operand 5, single buffered']
    #allocation6 [shape = 's32[1]{0}', space=sflag, size = 0x4, scoped, tag = 'scoped memory for tpu_custom_call.1']
    #allocation7 [shape = 'u8[512]{0}', space=vmem, size = 0x400, scoped, tag = 'input window, operand 7, single buffered']
    #allocation8 [shape = 'u8[1024]{0}', space=vmem, size = 0x400, scoped, tag = 'input window, operand 10, single buffered']
    #allocation9 [shape = 's32[1]{0}', space=sflag, size = 0x4, scoped, tag = 'scoped memory for tpu_custom_call.1']
    #allocation10 [shape = 'u8[131072]{0}', space=vmem, size = 0x20000, scoped, tag = 'input window, operand 11, single buffered']
    #allocation11 [shape = 'u8[8192]{0}', space=vmem, size = 0x2000, scoped, tag = 'output window, operand 0, single buffered']
    %20 = vsyncpa [#allocation3], 0
    %21 = vsyncpa [#allocation6], 0
    %22 = vsyncpa [#allocation9], 0
    %23 = vsyncpa [#allocation4], 0
    // Predicated region
    $region2: #{tpu_custom_call.1} parent=1 // pred_check
      _
    $region3: #{tpu_custom_call.1} parent=1 // pred_check_branch
      %25 = sbr.rel (0) target = $region5
    $region4: #{tpu_custom_call.1} parent=1 // pred_region
      %s27 = ssub.s32 128, 128
      %28 = vsyncadd [#allocation3], %s27
      %s29 = sshll.u32 [#allocation2], 4
      %s30 = int_to_ptr.vmem [resolvable:$true] %s29
      %35 = dma.hbm_to_vmem [thread:$0]  %s0, 128, %s30, [#allocation3], 64, 64, 4
    $region5: #{tpu_custom_call.1} parent=1 // pred_fallthru
      _
    // Predicated region
    $region6: #{tpu_custom_call.1} parent=1 // pred_check
      _
    $region7: #{tpu_custom_call.1} parent=1 // pred_check_branch
      %37 = sbr.rel (0) target = $region9
    $region8: #{tpu_custom_call.1} parent=1 // pred_region
      _
    $region9: #{tpu_custom_call.1} parent=1 // pred_fallthru
      _
    // Predicated region
    $region10: #{tpu_custom_call.1} parent=1 // pred_check
      _
    $region11: #{tpu_custom_call.1} parent=1 // pred_check_branch
      %39 = sbr.rel (0) target = $region13
    $region12: #{tpu_custom_call.1} parent=1 // pred_region
      _
    $region13: #{tpu_custom_call.1} parent=1 // pred_fallthru
      _
    // Predicated region
    $region14: #{tpu_custom_call.1} parent=1 // pred_check
      _
    $region15: #{tpu_custom_call.1} parent=1 // pred_check_branch
      %41 = sbr.rel (0) target = $region17
    $region16: #{tpu_custom_call.1} parent=1 // pred_region
      _
    $region17: #{tpu_custom_call.1} parent=1 // pred_fallthru
      _
    // Predicated region
    $region18: #{tpu_custom_call.1} parent=1 // pred_check
      _
    $region19: #{tpu_custom_call.1} parent=1 // pred_check_branch
      %43 = sbr.rel (0) target = $region21
    $region20: #{tpu_custom_call.1} parent=1 // pred_region
      _
    $region21: #{tpu_custom_call.1} parent=1 // pred_fallthru
      _
    // Predicated region
    $region22: #{tpu_custom_call.1} parent=1 // pred_check
      _
    $region23: #{tpu_custom_call.1} parent=1 // pred_check_branch
      %45 = sbr.rel (0) target = $region25
    $region24: #{tpu_custom_call.1} parent=1 // pred_region
      %s47 = ssub.s32 32, 32
      %48 = vsyncadd [#allocation6], %s47
      %s50 = sshll.u32 [#allocation5], 4
      %s51 = int_to_ptr.vmem [resolvable:$true] %s50
      %53 = dma.hbm_to_vmem [thread:$0]  %s5, 32, %s51, [#allocation6]
    $region25: #{tpu_custom_call.1} parent=1 // pred_fallthru
      _
    // Predicated region
    $region26: #{tpu_custom_call.1} parent=1 // pred_check
      _
    $region27: #{tpu_custom_call.1} parent=1 // pred_check_branch
      %55 = sbr.rel (0) target = $region29
    $region28: #{tpu_custom_call.1} parent=1 // pred_region
      _
    $region29: #{tpu_custom_call.1} parent=1 // pred_fallthru
      _
    // Predicated region
    $region30: #{tpu_custom_call.1} parent=1 // pred_check
      _
    $region31: #{tpu_custom_call.1} parent=1 // pred_check_branch
      %57 = sbr.rel (0) target = $region33
    $region32: #{tpu_custom_call.1} parent=1 // pred_region
      %s59 = ssub.s32 16, 16
      %60 = vsyncadd [#allocation6], %s59
      %s62 = sshll.u32 [#allocation7], 4
      %s63 = int_to_ptr.vmem [resolvable:$true] %s62
      %65 = dma.hbm_to_vmem [thread:$0]  %s7, 16, %s63, [#allocation6]
    $region33: #{tpu_custom_call.1} parent=1 // pred_fallthru
      _
    // Predicated region
    $region34: #{tpu_custom_call.1} parent=1 // pred_check
      _
    $region35: #{tpu_custom_call.1} parent=1 // pred_check_branch
      %67 = sbr.rel (0) target = $region37
    $region36: #{tpu_custom_call.1} parent=1 // pred_region
      _
    $region37: #{tpu_custom_call.1} parent=1 // pred_fallthru
      _
    // Predicated region
    $region38: #{tpu_custom_call.1} parent=1 // pred_check
      _
    $region39: #{tpu_custom_call.1} parent=1 // pred_check_branch
      %69 = sbr.rel (0) target = $region41
    $region40: #{tpu_custom_call.1} parent=1 // pred_region
      _
    $region41: #{tpu_custom_call.1} parent=1 // pred_fallthru
      _
    // Predicated region
    $region42: #{tpu_custom_call.1} parent=1 // pred_check
      _
    $region43: #{tpu_custom_call.1} parent=1 // pred_check_branch
      %71 = sbr.rel (0) target = $region45
    $region44: #{tpu_custom_call.1} parent=1 // pred_region
      %s73 = ssub.s32 32, 32
      %74 = vsyncadd [#allocation9], %s73
      %s76 = sshll.u32 [#allocation8], 4
      %s77 = int_to_ptr.vmem [resolvable:$true] %s76
      %79 = dma.hbm_to_vmem [thread:$0]  %s10, 32, %s77, [#allocation9]
    $region45: #{tpu_custom_call.1} parent=1 // pred_fallthru
      _
    // Predicated region
    $region46: #{tpu_custom_call.1} parent=1 // pred_check
      _
    $region47: #{tpu_custom_call.1} parent=1 // pred_check_branch
      %81 = sbr.rel (0) target = $region49
    $region48: #{tpu_custom_call.1} parent=1 // pred_region
      %s83 = ssub.s32 4096, 4096
      %84 = vsyncadd [#allocation9], %s83
      %s85 = sshll.u32 [#allocation10], 4
      %s86 = int_to_ptr.vmem [resolvable:$true] %s85
      %91 = dma.hbm_to_vmem [thread:$0]  %s11, 4096, %s86, [#allocation9], 128, 128, 8
    $region49: #{tpu_custom_call.1} parent=1 // pred_fallthru
      _
    // Predicated region
    $region50: #{tpu_custom_call.1} parent=1 // pred_check
      _
    $region51: #{tpu_custom_call.1} parent=1 // pred_check_branch
      %93 = sbr.rel (0) target = $region53
    $region52: #{tpu_custom_call.1} parent=1 // pred_region
      _
    $region53: #{tpu_custom_call.1} parent=1 // pred_fallthru
      _
    // Predicated region
    $region54: #{tpu_custom_call.1} parent=1 // pred_check
      _
    $region55: #{tpu_custom_call.1} parent=1 // pred_check_branch
      %95 = sbr.rel (0) target = $region57
    $region56: #{tpu_custom_call.1} parent=1 // pred_region
      _
    $region57: #{tpu_custom_call.1} parent=1 // pred_fallthru
      _
    // Predicated region
    $region58: #{tpu_custom_call.1} parent=1 // pred_check
      _
    $region59: #{tpu_custom_call.1} parent=1 // pred_check_branch
      %97 = sbr.rel (0) target = $region61
    $region60: #{tpu_custom_call.1} parent=1 // pred_region
      _
    $region61: #{tpu_custom_call.1} parent=1 // pred_fallthru
      _
    // Predicated region
    $region62: #{tpu_custom_call.1} parent=1 // pred_check
      _
    $region63: #{tpu_custom_call.1} parent=1 // pred_check_branch
      %99 = sbr.rel (0) target = $region65
    $region64: #{tpu_custom_call.1} parent=1 // pred_region
      %100 = dma.done [#allocation3], 128
    $region65: #{tpu_custom_call.1} parent=1 // pred_fallthru
      _
    // Predicated region
    $region66: #{tpu_custom_call.1} parent=1 // pred_check
      _
    $region67: #{tpu_custom_call.1} parent=1 // pred_check_branch
      %102 = sbr.rel (0) target = $region69
    $region68: #{tpu_custom_call.1} parent=1 // pred_region
      %103 = dma.done [#allocation6], 32
    $region69: #{tpu_custom_call.1} parent=1 // pred_fallthru
      _
    // Predicated region
    $region70: #{tpu_custom_call.1} parent=1 // pred_check
      _
    $region71: #{tpu_custom_call.1} parent=1 // pred_check_branch
      %105 = sbr.rel (0) target = $region73
    $region72: #{tpu_custom_call.1} parent=1 // pred_region
      %106 = dma.done [#allocation6], 16
    $region73: #{tpu_custom_call.1} parent=1 // pred_fallthru
      _
    // Predicated region
    $region74: #{tpu_custom_call.1} parent=1 // pred_check
      _
    $region75: #{tpu_custom_call.1} parent=1 // pred_check_branch
      %108 = sbr.rel (0) target = $region77
    $region76: #{tpu_custom_call.1} parent=1 // pred_region
      %109 = dma.done [#allocation9], 32
    $region77: #{tpu_custom_call.1} parent=1 // pred_fallthru
      _
    // Predicated region
    $region78: #{tpu_custom_call.1} parent=1 // pred_check
      _
    $region79: #{tpu_custom_call.1} parent=1 // pred_check_branch
      %111 = sbr.rel (0) target = $region81
    $region80: #{tpu_custom_call.1} parent=1 // pred_region
      %112 = dma.done [#allocation9], 4096
    $region81: #{tpu_custom_call.1} parent=1 // pred_fallthru
      _
    %v114 = vld [vmem:[#allocation2] sm:$0xf]
    %v115 = vld [vmem:[#allocation2 + $0x4] sm:$0xf]
    %v116 = vld [vmem:[%s1] sm:$0xff]
    %v117 = vld [vmem:[%s1 + $0x8] sm:$0xff]
    %v118 = vld [vmem:[%s2] sm:$0xff]
    %v119 = vld [vmem:[%s2 + $0x8] sm:$0xff]
    %v120 = vld [vmem:[%s2 + $0x10] sm:$0x33]
    %v121 = vld [vmem:[%s3] sm:$0x3]
    %v123 = vlaneseq
    %v124 = vshrl.u32 %v123, 7
    %v125 = vsub.s32 0, %v124
    %v126 = vrot.slane %v121, %v125
    %v127 = vlaneseq
    %v128 = vshrl.u32 %v127, 7
    %v129 = vsub.s32 1, %v128
    %v130 = vrot.slane %v121, %v129
    %v135 = vunpack.c.l.b16 %v114
    %v136 = vunpack.c.l.b16 %v115
    %v137 = vpack.c.b16 %v136, %v135
    %v141 = vunpack.c.l.b16 %v118
    %v142 = vunpack.c.h.b16 %v118
    %v143 = vunpack.c.l.b16 %v119
    %v144 = vunpack.c.h.b16 %v119
    %v145 = vunpack.c.l.b16 %v120
    %v146 = vunpack.c.h.b16 %v120
    %v147 = vpack.c.b16 %v143, %v141
    %v148 = vpack.c.b16 %v144, %v142
    %v149 = vpack.c.b16 %v145, %v145
    %v150 = vpack.c.b16 %v146, %v146
    %vm153 = vcmask 154624
    %v155 = vsel %vm153, %v137, 0
    %vm157 = vcmask 1040384
    %vm158 = vcmask 1041408
    %v159 = vsel %vm157, 4294967295, 65535
    %v160 = vsel %vm158, %v159, 0
    %v162 = vand.u32 %v149, %v160
    %v165 = vand.u32 %v150, %v160
    %167 = vmatprep.subr.bf16.mxu0 0
    %168 = vmatpush1.bf16.msra.mxu0 0
    %169 = vmatprep.subr.bf16.mxu0 0
    %170 = vmatpush1.bf16.msra.mxu0 0
    %171 = vmatprep.subr.bf16.mxu0 0
    %172 = vmatpush1.bf16.msra.mxu0 0
    %173 = vmatprep.subr.bf16.mxu0 0
    %174 = vmatpush1.bf16.msra.mxu0 0
    %175 = vmatprep.subr.bf16.mxu0 0
    %176 = vmatpush1.bf16.msra.mxu0 0
    %177 = vmatprep.subr.bf16.mxu0 0
    %178 = vmatpush1.bf16.msra.mxu0 0
    %179 = vmatprep.subr.bf16.mxu0 %v165
    %180 = vmatpush1.bf16.msra.mxu0 %v162
    %181 = vmatprep.subr.bf16.mxu0 %v148
    %182 = vmatpush1.bf16.msra.mxu0 %v147
    %183 = vmatprep.subr.bf16.mxu0 0
    %184 = vmatpush2.bf16.msra.mxu0 0
    %185 = vmatprep.subr.bf16.mxu0 0
    %186 = vmatpush2.bf16.msra.mxu0 0
    %187 = vmatprep.subr.bf16.mxu0 0
    %188 = vmatpush2.bf16.msra.mxu0 0
    %189 = vmatprep.subr.bf16.mxu0 0
    %190 = vmatpush2.bf16.msra.mxu0 0
    %191 = vmatprep.subr.bf16.mxu0 0
    %192 = vmatpush2.bf16.msra.mxu0 0
    %193 = vmatprep.subr.bf16.mxu0 0
    %194 = vmatpush2.bf16.msra.mxu0 0
    %195 = vmatprep.subr.bf16.mxu0 0
    %196 = vmatpush2.bf16.msra.mxu0 0
    %197 = vmatprep.subr.bf16.mxu0 0
    %198 = vmatpush2.bf16.msra.mxu0 0
    %199 = vmatprep.mubr.bf16.mxu0 0
    %200 = vmatmul.mubr.bf16.gmra.mxu0 %v155
    %v201 = vpop.f32.mrf.mxu0
    %v202 = vadd.f32 %v126, %v201
    %v203 = vpop.f32.mrf.mxu0
    %v204 = vadd.f32 %v130, %v203
    %v205 = vpop.f32.mrf.mxu0
    %v206 = vadd.f32 %v126, %v205
    %v207 = vpop.f32.mrf.mxu0
    %v208 = vadd.f32 %v130, %v207
    %209 = vdwg.mxu0
    %v210 = vmax.f32 %v202, 0.0
    %v211 = vmax.f32 %v204, 0.0
    %v212 = vmax.f32 %v206, 0.0
    %v213 = vmax.f32 %v208, 0.0
    %v214 = vpack.c.bf16 %v212, %v210
    %v215 = vpack.c.bf16 %v213, %v211
    %v216 = vld [vmem:[%s4] sm:$0xff]
    %v217 = vld [vmem:[%s4 + $0x8] sm:$0xff]
    %v218 = vld [vmem:[%s4 + $0x10] sm:$0xff]
    %v219 = vld [vmem:[%s4 + $0x18] sm:$0xff]
    %v220 = vld [vmem:[%s4 + $0x20] sm:$0xff]
    %v221 = vld [vmem:[%s4 + $0x28] sm:$0xff]
    %v222 = vld [vmem:[%s4 + $0x30] sm:$0xff]
    %v223 = vld [vmem:[%s4 + $0x38] sm:$0xff]
    %v224 = vld [vmem:[%s4 + $0x40] sm:$0xff]
    %v225 = vld [vmem:[%s4 + $0x48] sm:$0xff]
    %v226 = vld [vmem:[%s4 + $0x50] sm:$0xff]
    %v227 = vld [vmem:[%s4 + $0x58] sm:$0xff]
    %v228 = vld [vmem:[%s4 + $0x60] sm:$0xff]
    %v229 = vld [vmem:[%s4 + $0x68] sm:$0xff]
    %v230 = vld [vmem:[%s4 + $0x70] sm:$0xff]
    %v231 = vld [vmem:[%s4 + $0x78] sm:$0xff]
    %v232 = vld [vmem:[%s4 + $0x80] sm:$0xff]
    %v233 = vld [vmem:[%s4 + $0x88] sm:$0xff]
    %v234 = vld [vmem:[%s4 + $0x90] sm:$0xff]
    %v235 = vld [vmem:[%s4 + $0x98] sm:$0xff]
    %v236 = vld [vmem:[%s4 + $0xa0] sm:$0xff]
    %v237 = vld [vmem:[%s4 + $0xa8] sm:$0xff]
    %v238 = vld [vmem:[%s4 + $0xb0] sm:$0xff]
    %v239 = vld [vmem:[%s4 + $0xb8] sm:$0xff]
    %v240 = vld [vmem:[%s4 + $0xc0] sm:$0xff]
    %v241 = vld [vmem:[%s4 + $0xc8] sm:$0xff]
    %v242 = vld [vmem:[%s4 + $0xd0] sm:$0xff]
    %v243 = vld [vmem:[%s4 + $0xd8] sm:$0xff]
    %v244 = vld [vmem:[%s4 + $0xe0] sm:$0xff]
    %v245 = vld [vmem:[%s4 + $0xe8] sm:$0xff]
    %v246 = vld [vmem:[%s4 + $0xf0] sm:$0xff]
    %v247 = vld [vmem:[%s4 + $0xf8] sm:$0xff]
    %v248 = vld [vmem:[#allocation5] sm:$0x3]
    %v250 = vlaneseq
    %v251 = vshrl.u32 %v250, 7
    %v252 = vsub.s32 0, %v251
    %v253 = vrot.slane %v248, %v252
    %v254 = vlaneseq
    %v255 = vshrl.u32 %v254, 7
    %v256 = vsub.s32 1, %v255
    %v257 = vrot.slane %v248, %v256
    %v292 = vunpack.c.l.b16 %v216
    %v293 = vunpack.c.h.b16 %v216
    %v294 = vunpack.c.l.b16 %v217
    %v295 = vunpack.c.h.b16 %v217
    %v296 = vunpack.c.l.b16 %v218
    %v297 = vunpack.c.h.b16 %v218
    %v298 = vunpack.c.l.b16 %v219
    %v299 = vunpack.c.h.b16 %v219
    %v300 = vunpack.c.l.b16 %v220
    %v301 = vunpack.c.h.b16 %v220
    %v302 = vunpack.c.l.b16 %v221
    %v303 = vunpack.c.h.b16 %v221
    %v304 = vunpack.c.l.b16 %v222
    %v305 = vunpack.c.h.b16 %v222
    %v306 = vunpack.c.l.b16 %v223
    %v307 = vunpack.c.h.b16 %v223
    %v308 = vunpack.c.l.b16 %v224
    %v309 = vunpack.c.h.b16 %v224
    %v310 = vunpack.c.l.b16 %v225
    %v311 = vunpack.c.h.b16 %v225
    %v312 = vunpack.c.l.b16 %v226
    %v313 = vunpack.c.h.b16 %v226
    %v314 = vunpack.c.l.b16 %v227
    %v315 = vunpack.c.h.b16 %v227
    %v316 = vunpack.c.l.b16 %v228
    %v317 = vunpack.c.h.b16 %v228
    %v318 = vunpack.c.l.b16 %v229
    %v319 = vunpack.c.h.b16 %v229
    %v320 = vunpack.c.l.b16 %v230
    %v321 = vunpack.c.h.b16 %v230
    %v322 = vunpack.c.l.b16 %v231
    %v323 = vunpack.c.h.b16 %v231
    %v324 = vunpack.c.l.b16 %v232
    %v325 = vunpack.c.h.b16 %v232
    %v326 = vunpack.c.l.b16 %v233
    %v327 = vunpack.c.h.b16 %v233
    %v328 = vunpack.c.l.b16 %v234
    %v329 = vunpack.c.h.b16 %v234
    %v330 = vunpack.c.l.b16 %v235
    %v331 = vunpack.c.h.b16 %v235
    %v332 = vunpack.c.l.b16 %v236
    %v333 = vunpack.c.h.b16 %v236
    %v334 = vunpack.c.l.b16 %v237
    %v335 = vunpack.c.h.b16 %v237
    %v336 = vunpack.c.l.b16 %v238
    %v337 = vunpack.c.h.b16 %v238
    %v338 = vunpack.c.l.b16 %v239
    %v339 = vunpack.c.h.b16 %v239
    %v340 = vunpack.c.l.b16 %v240
    %v341 = vunpack.c.h.b16 %v240
    %v342 = vunpack.c.l.b16 %v241
    %v343 = vunpack.c.h.b16 %v241
    %v344 = vunpack.c.l.b16 %v242
    %v345 = vunpack.c.h.b16 %v242
    %v346 = vunpack.c.l.b16 %v243
    %v347 = vunpack.c.h.b16 %v243
    %v348 = vunpack.c.l.b16 %v244
    %v349 = vunpack.c.h.b16 %v244
    %v350 = vunpack.c.l.b16 %v245
    %v351 = vunpack.c.h.b16 %v245
    %v352 = vunpack.c.l.b16 %v246
    %v353 = vunpack.c.h.b16 %v246
    %v354 = vunpack.c.l.b16 %v247
    %v355 = vunpack.c.h.b16 %v247
    %v356 = vpack.c.b16 %v294, %v292
    %v357 = vpack.c.b16 %v295, %v293
    %v358 = vpack.c.b16 %v298, %v296
    %v359 = vpack.c.b16 %v299, %v297
    %v360 = vpack.c.b16 %v302, %v300
    %v361 = vpack.c.b16 %v303, %v301
    %v362 = vpack.c.b16 %v306, %v304
    %v363 = vpack.c.b16 %v307, %v305
    %v364 = vpack.c.b16 %v310, %v308
    %v365 = vpack.c.b16 %v311, %v309
    %v366 = vpack.c.b16 %v314, %v312
    %v367 = vpack.c.b16 %v315, %v313
    %v368 = vpack.c.b16 %v318, %v316
    %v369 = vpack.c.b16 %v319, %v317
    %v370 = vpack.c.b16 %v322, %v320
    %v371 = vpack.c.b16 %v323, %v321
    %v372 = vpack.c.b16 %v326, %v324
    %v373 = vpack.c.b16 %v327, %v325
    %v374 = vpack.c.b16 %v330, %v328
    %v375 = vpack.c.b16 %v331, %v329
    %v376 = vpack.c.b16 %v334, %v332
    %v377 = vpack.c.b16 %v335, %v333
    %v378 = vpack.c.b16 %v338, %v336
    %v379 = vpack.c.b16 %v339, %v337
    %v380 = vpack.c.b16 %v342, %v340
    %v381 = vpack.c.b16 %v343, %v341
    %v382 = vpack.c.b16 %v346, %v344
    %v383 = vpack.c.b16 %v347, %v345
    %v384 = vpack.c.b16 %v350, %v348
    %v385 = vpack.c.b16 %v351, %v349
    %v386 = vpack.c.b16 %v354, %v352
    %v387 = vpack.c.b16 %v355, %v353
    %420 = vmatprep.subr.bf16.mxu0 %v371
    %421 = vmatpush1.bf16.msra.mxu0 %v370
    %422 = vmatprep.subr.bf16.mxu0 %v369
    %423 = vmatpush1.bf16.msra.mxu0 %v368
    %424 = vmatprep.subr.bf16.mxu0 %v367
    %425 = vmatpush1.bf16.msra.mxu0 %v366
    %426 = vmatprep.subr.bf16.mxu0 %v365
    %427 = vmatpush1.bf16.msra.mxu0 %v364
    %428 = vmatprep.subr.bf16.mxu0 %v363
    %429 = vmatpush1.bf16.msra.mxu0 %v362
    %430 = vmatprep.subr.bf16.mxu0 %v361
    %431 = vmatpush1.bf16.msra.mxu0 %v360
    %432 = vmatprep.subr.bf16.mxu0 %v359
    %433 = vmatpush1.bf16.msra.mxu0 %v358
    %434 = vmatprep.subr.bf16.mxu0 %v357
    %435 = vmatpush1.bf16.msra.mxu0 %v356
    %436 = vmatprep.subr.bf16.mxu0 %v387
    %437 = vmatpush2.bf16.msra.mxu0 %v386
    %438 = vmatprep.subr.bf16.mxu0 %v385
    %439 = vmatpush2.bf16.msra.mxu0 %v384
    %440 = vmatprep.subr.bf16.mxu0 %v383
    %441 = vmatpush2.bf16.msra.mxu0 %v382
    %442 = vmatprep.subr.bf16.mxu0 %v381
    %443 = vmatpush2.bf16.msra.mxu0 %v380
    %444 = vmatprep.subr.bf16.mxu0 %v379
    %445 = vmatpush2.bf16.msra.mxu0 %v378
    %446 = vmatprep.subr.bf16.mxu0 %v377
    %447 = vmatpush2.bf16.msra.mxu0 %v376
    %448 = vmatprep.subr.bf16.mxu0 %v375
    %449 = vmatpush2.bf16.msra.mxu0 %v374
    %450 = vmatprep.subr.bf16.mxu0 %v373
    %451 = vmatpush2.bf16.msra.mxu0 %v372
    %452 = vmatprep.mubr.bf16.mxu0 %v215
    %453 = vmatmul.mubr.bf16.gmra.mxu0 %v214
    %v454 = vpop.f32.mrf.mxu0
    %v455 = vadd.f32 %v253, %v454
    %v456 = vpop.f32.mrf.mxu0
    %v457 = vadd.f32 %v257, %v456
    %v458 = vpop.f32.mrf.mxu0
    %v459 = vadd.f32 %v253, %v458
    %v460 = vpop.f32.mrf.mxu0
    %v461 = vadd.f32 %v257, %v460
    %462 = vdwg.mxu0
    %v463 = vmax.f32 %v455, 0.0
    %v464 = vmax.f32 %v457, 0.0
    %v465 = vmax.f32 %v459, 0.0
    %v466 = vmax.f32 %v461, 0.0
    %v467 = vpack.c.bf16 %v465, %v463
    %v468 = vpack.c.bf16 %v466, %v464
    %v469 = vld [vmem:[%s6] sm:$0xf]
    %v470 = vld [vmem:[%s6 + $0x4] sm:$0xf]
    %v471 = vld [vmem:[%s6 + $0x8] sm:$0xf]
    %v472 = vld [vmem:[%s6 + $0xc] sm:$0xf]
    %v473 = vld [vmem:[%s6 + $0x10] sm:$0xf]
    %v474 = vld [vmem:[%s6 + $0x14] sm:$0xf]
    %v475 = vld [vmem:[%s6 + $0x18] sm:$0xf]
    %v476 = vld [vmem:[%s6 + $0x1c] sm:$0xf]
    %v477 = vld [vmem:[%s6 + $0x20] sm:$0xf]
    %v478 = vld [vmem:[%s6 + $0x24] sm:$0xf]
    %v479 = vld [vmem:[%s6 + $0x28] sm:$0xf]
    %v480 = vld [vmem:[%s6 + $0x2c] sm:$0xf]
    %v481 = vld [vmem:[%s6 + $0x30] sm:$0xf]
    %v482 = vld [vmem:[%s6 + $0x34] sm:$0xf]
    %v483 = vld [vmem:[%s6 + $0x38] sm:$0xf]
    %v484 = vld [vmem:[%s6 + $0x3c] sm:$0xf]
    %v485 = vld [vmem:[%s6 + $0x40] sm:$0xf]
    %v486 = vld [vmem:[%s6 + $0x44] sm:$0xf]
    %v487 = vld [vmem:[%s6 + $0x48] sm:$0xf]
    %v488 = vld [vmem:[%s6 + $0x4c] sm:$0xf]
    %v489 = vld [vmem:[%s6 + $0x50] sm:$0xf]
    %v490 = vld [vmem:[%s6 + $0x54] sm:$0xf]
    %v491 = vld [vmem:[%s6 + $0x58] sm:$0xf]
    %v492 = vld [vmem:[%s6 + $0x5c] sm:$0xf]
    %v493 = vld [vmem:[%s6 + $0x60] sm:$0xf]
    %v494 = vld [vmem:[%s6 + $0x64] sm:$0xf]
    %v495 = vld [vmem:[%s6 + $0x68] sm:$0xf]
    %v496 = vld [vmem:[%s6 + $0x6c] sm:$0xf]
    %v497 = vld [vmem:[%s6 + $0x70] sm:$0xf]
    %v498 = vld [vmem:[%s6 + $0x74] sm:$0xf]
    %v499 = vld [vmem:[%s6 + $0x78] sm:$0xf]
    %v500 = vld [vmem:[%s6 + $0x7c] sm:$0xf]
    %v501 = vld [vmem:[#allocation7] sm:$0x1]
    %v503 = vlaneseq
    %v504 = vshrl.u32 %v503, 7
    %v505 = vsub.s32 0, %v504
    %v506 = vrot.slane %v501, %v505
    %v540 = vunpack.c.l.b16 %v469
    %v541 = vunpack.c.l.b16 %v470
    %v542 = vunpack.c.l.b16 %v471
    %v543 = vunpack.c.l.b16 %v472
    %v544 = vunpack.c.l.b16 %v473
    %v545 = vunpack.c.l.b16 %v474
    %v546 = vunpack.c.l.b16 %v475
    %v547 = vunpack.c.l.b16 %v476
    %v548 = vunpack.c.l.b16 %v477
    %v549 = vunpack.c.l.b16 %v478
    %v550 = vunpack.c.l.b16 %v479
    %v551 = vunpack.c.l.b16 %v480
    %v552 = vunpack.c.l.b16 %v481
    %v553 = vunpack.c.l.b16 %v482
    %v554 = vunpack.c.l.b16 %v483
    %v555 = vunpack.c.l.b16 %v484
    %v556 = vunpack.c.l.b16 %v485
    %v557 = vunpack.c.l.b16 %v486
    %v558 = vunpack.c.l.b16 %v487
    %v559 = vunpack.c.l.b16 %v488
    %v560 = vunpack.c.l.b16 %v489
    %v561 = vunpack.c.l.b16 %v490
    %v562 = vunpack.c.l.b16 %v491
    %v563 = vunpack.c.l.b16 %v492
    %v564 = vunpack.c.l.b16 %v493
    %v565 = vunpack.c.l.b16 %v494
    %v566 = vunpack.c.l.b16 %v495
    %v567 = vunpack.c.l.b16 %v496
    %v568 = vunpack.c.l.b16 %v497
    %v569 = vunpack.c.l.b16 %v498
    %v570 = vunpack.c.l.b16 %v499
    %v571 = vunpack.c.l.b16 %v500
    %v572 = vpack.c.b16 %v541, %v540
    %v573 = vpack.c.b16 %v543, %v542
    %v574 = vpack.c.b16 %v545, %v544
    %v575 = vpack.c.b16 %v547, %v546
    %v576 = vpack.c.b16 %v549, %v548
    %v577 = vpack.c.b16 %v551, %v550
    %v578 = vpack.c.b16 %v553, %v552
    %v579 = vpack.c.b16 %v555, %v554
    %v580 = vpack.c.b16 %v557, %v556
    %v581 = vpack.c.b16 %v559, %v558
    %v582 = vpack.c.b16 %v561, %v560
    %v583 = vpack.c.b16 %v563, %v562
    %v584 = vpack.c.b16 %v565, %v564
    %v585 = vpack.c.b16 %v567, %v566
    %v586 = vpack.c.b16 %v569, %v568
    %v587 = vpack.c.b16 %v571, %v570
    %604 = vmatprep.subr.bf16.mxu0 0
    %605 = vmatpush1.bf16.msra.mxu0 %v579
    %606 = vmatprep.subr.bf16.mxu0 0
    %607 = vmatpush1.bf16.msra.mxu0 %v578
    %608 = vmatprep.subr.bf16.mxu0 0
    %609 = vmatpush1.bf16.msra.mxu0 %v577
    %610 = vmatprep.subr.bf16.mxu0 0
    %611 = vmatpush1.bf16.msra.mxu0 %v576
    %612 = vmatprep.subr.bf16.mxu0 0
    %613 = vmatpush1.bf16.msra.mxu0 %v575
    %614 = vmatprep.subr.bf16.mxu0 0
    %615 = vmatpush1.bf16.msra.mxu0 %v574
    %616 = vmatprep.subr.bf16.mxu0 0
    %617 = vmatpush1.bf16.msra.mxu0 %v573
    %618 = vmatprep.subr.bf16.mxu0 0
    %619 = vmatpush1.bf16.msra.mxu0 %v572
    %620 = vmatprep.subr.bf16.mxu0 0
    %621 = vmatpush2.bf16.msra.mxu0 %v587
    %622 = vmatprep.subr.bf16.mxu0 0
    %623 = vmatpush2.bf16.msra.mxu0 %v586
    %624 = vmatprep.subr.bf16.mxu0 0
    %625 = vmatpush2.bf16.msra.mxu0 %v585
    %626 = vmatprep.subr.bf16.mxu0 0
    %627 = vmatpush2.bf16.msra.mxu0 %v584
    %628 = vmatprep.subr.bf16.mxu0 0
    %629 = vmatpush2.bf16.msra.mxu0 %v583
    %630 = vmatprep.subr.bf16.mxu0 0
    %631 = vmatpush2.bf16.msra.mxu0 %v582
    %632 = vmatprep.subr.bf16.mxu0 0
    %633 = vmatpush2.bf16.msra.mxu0 %v581
    %634 = vmatprep.subr.bf16.mxu0 0
    %635 = vmatpush2.bf16.msra.mxu0 %v580
    %636 = vmatprep.mubr.bf16.mxu0 %v468
    %637 = vmatmul.mubr.bf16.gmra.mxu0 %v467
    %v638 = vpop.f32.mrf.mxu0
    %v639 = vadd.f32 %v506, %v638
    %v640 = vpop.f32.mrf.mxu0
    %v641 = vpop.f32.mrf.mxu0
    %v642 = vadd.f32 %v506, %v641
    %v643 = vpop.f32.mrf.mxu0
    %644 = vdwg.mxu0
    %v645 = vmax.f32 %v639, -4.0
    %v646 = vmax.f32 %v642, -4.0
    %v647 = vmin.f32 %v645, 15.0
    %v648 = vmin.f32 %v646, 15.0
    %v649 = vmul.f32 %v647, 1.442695
    %v650 = vpow.pop %v649
    %v651 = vmul.f32 %v648, 1.442695
    %v652 = vpow.pop %v651
    %655 = vrot.lane.b32.xlu0 %v116, 8
    %v656 = vpop.permute.xlu0 %655
    %657 = vrot.lane.b32.xlu0 %v117, 8
    %v658 = vpop.permute.xlu0 %657
    %v661 = vmul.f32 %v650, %v656
    %v662 = vmul.f32 %v652, %v658
    %665 = vrot.lane.b32.xlu0 %v661, 120
    %v666 = vpop.permute.xlu0 %665
    %667 = vrot.lane.b32.xlu0 %v662, 120
    %v668 = vpop.permute.xlu0 %667
    %v671 = vadd.f32 %v639, %v666
    %v672 = vadd.f32 %v642, %v668
    %v673 = vld [vmem:[%s8] sm:$0xff]
    %v674 = vld [vmem:[%s8 + $0x8] sm:$0xff]
    %v675 = vld [vmem:[%s8 + $0x10] sm:$0x33]
    %v676 = vpack.c.bf16 %v672, %v671
    %v677 = vld [vmem:[%s9] sm:$0xff]
    %v679 = vunpack.c.l.b16 %v677
    %v680 = vunpack.c.h.b16 %v677
    %v681 = vpack.c.b16 %v679, %v679
    %v682 = vpack.c.b16 %v680, %v680
    %vm683 = vcmask 64512
    %v685 = vsel %vm683, %v676, 0
    %vm687 = vcmask 1043456
    %v689 = vsel %vm687, %v681, 0
    %v692 = vsel %vm687, %v682, 0
    %694 = vmatprep.subr.bf16.mxu0 0
    %695 = vmatpush1.bf16.msra.mxu0 0
    %696 = vmatprep.subr.bf16.mxu0 0
    %697 = vmatpush1.bf16.msra.mxu0 0
    %698 = vmatprep.subr.bf16.mxu0 0
    %699 = vmatpush1.bf16.msra.mxu0 0
    %700 = vmatprep.subr.bf16.mxu0 0
    %701 = vmatpush1.bf16.msra.mxu0 0
    %702 = vmatprep.subr.bf16.mxu0 0
    %703 = vmatpush1.bf16.msra.mxu0 0
    %704 = vmatprep.subr.bf16.mxu0 0
    %705 = vmatpush1.bf16.msra.mxu0 0
    %706 = vmatprep.subr.bf16.mxu0 0
    %707 = vmatpush1.bf16.msra.mxu0 0
    %708 = vmatprep.subr.bf16.mxu0 %v692
    %709 = vmatpush1.bf16.msra.mxu0 %v689
    %710 = vmatprep.subr.bf16.mxu0 0
    %711 = vmatpush2.bf16.msra.mxu0 0
    %712 = vmatprep.subr.bf16.mxu0 0
    %713 = vmatpush2.bf16.msra.mxu0 0
    %714 = vmatprep.subr.bf16.mxu0 0
    %715 = vmatpush2.bf16.msra.mxu0 0
    %716 = vmatprep.subr.bf16.mxu0 0
    %717 = vmatpush2.bf16.msra.mxu0 0
    %718 = vmatprep.subr.bf16.mxu0 0
    %719 = vmatpush2.bf16.msra.mxu0 0
    %720 = vmatprep.subr.bf16.mxu0 0
    %721 = vmatpush2.bf16.msra.mxu0 0
    %722 = vmatprep.subr.bf16.mxu0 0
    %723 = vmatpush2.bf16.msra.mxu0 0
    %724 = vmatprep.subr.bf16.mxu0 0
    %725 = vmatpush2.bf16.msra.mxu0 0
    %726 = vmatprep.mubr.bf16.mxu0 0
    %727 = vmatmul.mubr.bf16.gmra.mxu0 %v685
    %v728 = vpop.f32.mrf.mxu0
    %v729 = vadd.f32 0.0, %v728
    %v730 = vpop.f32.mrf.mxu0
    %v731 = vadd.f32 0.0, %v730
    %v732 = vpop.f32.mrf.mxu0
    %v733 = vadd.f32 0.0, %v732
    %v734 = vpop.f32.mrf.mxu0
    %v735 = vadd.f32 0.0, %v734
    %736 = vdwg.mxu0
    %v740 = vunpack.c.l.b16 %v673
    %v741 = vunpack.c.h.b16 %v673
    %v742 = vunpack.c.l.b16 %v674
    %v743 = vunpack.c.h.b16 %v674
    %v744 = vunpack.c.l.b16 %v675
    %v745 = vunpack.c.h.b16 %v675
    %v746 = vpack.c.b16 %v742, %v740
    %v747 = vpack.c.b16 %v743, %v741
    %v748 = vpack.c.b16 %v744, %v744
    %v749 = vpack.c.b16 %v745, %v745
    %v753 = vand.u32 %v748, %v160
    %v756 = vand.u32 %v749, %v160
    %758 = vmatprep.subr.bf16.mxu0 0
    %759 = vmatpush1.bf16.msra.mxu0 0
    %760 = vmatprep.subr.bf16.mxu0 0
    %761 = vmatpush1.bf16.msra.mxu0 0
    %762 = vmatprep.subr.bf16.mxu0 0
    %763 = vmatpush1.bf16.msra.mxu0 0
    %764 = vmatprep.subr.bf16.mxu0 0
    %765 = vmatpush1.bf16.msra.mxu0 0
    %766 = vmatprep.subr.bf16.mxu0 0
    %767 = vmatpush1.bf16.msra.mxu0 0
    %768 = vmatprep.subr.bf16.mxu0 0
    %769 = vmatpush1.bf16.msra.mxu0 0
    %770 = vmatprep.subr.bf16.mxu0 %v756
    %771 = vmatpush1.bf16.msra.mxu0 %v753
    %772 = vmatprep.subr.bf16.mxu0 %v747
    %773 = vmatpush1.bf16.msra.mxu0 %v746
    %774 = vmatprep.subr.bf16.mxu0 0
    %775 = vmatpush2.bf16.msra.mxu0 0
    %776 = vmatprep.subr.bf16.mxu0 0
    %777 = vmatpush2.bf16.msra.mxu0 0
    %778 = vmatprep.subr.bf16.mxu0 0
    %779 = vmatpush2.bf16.msra.mxu0 0
    %780 = vmatprep.subr.bf16.mxu0 0
    %781 = vmatpush2.bf16.msra.mxu0 0
    %782 = vmatprep.subr.bf16.mxu0 0
    %783 = vmatpush2.bf16.msra.mxu0 0
    %784 = vmatprep.subr.bf16.mxu0 0
    %785 = vmatpush2.bf16.msra.mxu0 0
    %786 = vmatprep.subr.bf16.mxu0 0
    %787 = vmatpush2.bf16.msra.mxu0 0
    %788 = vmatprep.subr.bf16.mxu0 0
    %789 = vmatpush2.bf16.msra.mxu0 0
    %790 = vmatprep.mubr.bf16.mxu0 0
    %791 = vmatmul.mubr.bf16.gmra.mxu0 %v155
    %v792 = vpop.f32.mrf.mxu0
    %v793 = vadd.f32 %v729, %v792
    %v794 = vpop.f32.mrf.mxu0
    %v795 = vadd.f32 %v731, %v794
    %v796 = vpop.f32.mrf.mxu0
    %v797 = vadd.f32 %v733, %v796
    %v798 = vpop.f32.mrf.mxu0
    %v799 = vadd.f32 %v735, %v798
    %800 = vdwg.mxu0
    %v801 = vld [vmem:[#allocation8] sm:$0x3]
    %v803 = vlaneseq
    %v804 = vshrl.u32 %v803, 7
    %v805 = vsub.s32 0, %v804
    %v806 = vrot.slane %v801, %v805
    %v807 = vlaneseq
    %v808 = vshrl.u32 %v807, 7
    %v809 = vsub.s32 1, %v808
    %v810 = vrot.slane %v801, %v809
    %v813 = vadd.f32 %v793, %v806
    %v814 = vadd.f32 %v795, %v810
    %v815 = vadd.f32 %v797, %v806
    %v816 = vadd.f32 %v799, %v810
    %v817 = vmax.f32 %v813, 0.0
    %v818 = vmax.f32 %v814, 0.0
    %v819 = vmax.f32 %v815, 0.0
    %v820 = vmax.f32 %v816, 0.0
    %v821 = vpack.c.bf16 %v819, %v817
    %v822 = vpack.c.bf16 %v820, %v818
    %v823 = vld [vmem:[#allocation10] sm:$0xff]
    %v824 = vld [vmem:[#allocation10 + $0x8] sm:$0xff]
    %v825 = vld [vmem:[#allocation10 + $0x10] sm:$0xff]
    %v826 = vld [vmem:[#allocation10 + $0x18] sm:$0xff]
    %v827 = vld [vmem:[#allocation10 + $0x20] sm:$0xff]
    %v828 = vld [vmem:[#allocation10 + $0x28] sm:$0xff]
    %v829 = vld [vmem:[#allocation10 + $0x30] sm:$0xff]
    %v830 = vld [vmem:[#allocation10 + $0x38] sm:$0xff]
    %v831 = vld [vmem:[#allocation10 + $0x40] sm:$0xff]
    %v832 = vld [vmem:[#allocation10 + $0x48] sm:$0xff]
    %v833 = vld [vmem:[#allocation10 + $0x50] sm:$0xff]
    %v834 = vld [vmem:[#allocation10 + $0x58] sm:$0xff]
    %v835 = vld [vmem:[#allocation10 + $0x60] sm:$0xff]
    %v836 = vld [vmem:[#allocation10 + $0x68] sm:$0xff]
    %v837 = vld [vmem:[#allocation10 + $0x70] sm:$0xff]
    %v838 = vld [vmem:[#allocation10 + $0x78] sm:$0xff]
    %v839 = vld [vmem:[#allocation10 + $0x80] sm:$0xff]
    %v840 = vld [vmem:[#allocation10 + $0x88] sm:$0xff]
    %v841 = vld [vmem:[#allocation10 + $0x90] sm:$0xff]
    %v842 = vld [vmem:[#allocation10 + $0x98] sm:$0xff]
    %v843 = vld [vmem:[#allocation10 + $0xa0] sm:$0xff]
    %v844 = vld [vmem:[#allocation10 + $0xa8] sm:$0xff]
    %v845 = vld [vmem:[#allocation10 + $0xb0] sm:$0xff]
    %v846 = vld [vmem:[#allocation10 + $0xb8] sm:$0xff]
    %v847 = vld [vmem:[#allocation10 + $0xc0] sm:$0xff]
    %v848 = vld [vmem:[#allocation10 + $0xc8] sm:$0xff]
    %v849 = vld [vmem:[#allocation10 + $0xd0] sm:$0xff]
    %v850 = vld [vmem:[#allocation10 + $0xd8] sm:$0xff]
    %v851 = vld [vmem:[#allocation10 + $0xe0] sm:$0xff]
    %v852 = vld [vmem:[#allocation10 + $0xe8] sm:$0xff]
    %v853 = vld [vmem:[#allocation10 + $0xf0] sm:$0xff]
    %v854 = vld [vmem:[#allocation10 + $0xf8] sm:$0xff]
    %v855 = vld [vmem:[%s12] sm:$0x3]
    %v857 = vlaneseq
    %v858 = vshrl.u32 %v857, 7
    %v859 = vsub.s32 0, %v858
    %v860 = vrot.slane %v855, %v859
    %v861 = vlaneseq
    %v862 = vshrl.u32 %v861, 7
    %v863 = vsub.s32 1, %v862
    %v864 = vrot.slane %v855, %v863
    %v899 = vunpack.c.l.b16 %v823
    %v900 = vunpack.c.h.b16 %v823
    %v901 = vunpack.c.l.b16 %v824
    %v902 = vunpack.c.h.b16 %v824
    %v903 = vunpack.c.l.b16 %v825
    %v904 = vunpack.c.h.b16 %v825
    %v905 = vunpack.c.l.b16 %v826
    %v906 = vunpack.c.h.b16 %v826
    %v907 = vunpack.c.l.b16 %v827
    %v908 = vunpack.c.h.b16 %v827
    %v909 = vunpack.c.l.b16 %v828
    %v910 = vunpack.c.h.b16 %v828
    %v911 = vunpack.c.l.b16 %v829
    %v912 = vunpack.c.h.b16 %v829
    %v913 = vunpack.c.l.b16 %v830
    %v914 = vunpack.c.h.b16 %v830
    %v915 = vunpack.c.l.b16 %v831
    %v916 = vunpack.c.h.b16 %v831
    %v917 = vunpack.c.l.b16 %v832
    %v918 = vunpack.c.h.b16 %v832
    %v919 = vunpack.c.l.b16 %v833
    %v920 = vunpack.c.h.b16 %v833
    %v921 = vunpack.c.l.b16 %v834
    %v922 = vunpack.c.h.b16 %v834
    %v923 = vunpack.c.l.b16 %v835
    %v924 = vunpack.c.h.b16 %v835
    %v925 = vunpack.c.l.b16 %v836
    %v926 = vunpack.c.h.b16 %v836
    %v927 = vunpack.c.l.b16 %v837
    %v928 = vunpack.c.h.b16 %v837
    %v929 = vunpack.c.l.b16 %v838
    %v930 = vunpack.c.h.b16 %v838
    %v931 = vunpack.c.l.b16 %v839
    %v932 = vunpack.c.h.b16 %v839
    %v933 = vunpack.c.l.b16 %v840
    %v934 = vunpack.c.h.b16 %v840
    %v935 = vunpack.c.l.b16 %v841
    %v936 = vunpack.c.h.b16 %v841
    %v937 = vunpack.c.l.b16 %v842
    %v938 = vunpack.c.h.b16 %v842
    %v939 = vunpack.c.l.b16 %v843
    %v940 = vunpack.c.h.b16 %v843
    %v941 = vunpack.c.l.b16 %v844
    %v942 = vunpack.c.h.b16 %v844
    %v943 = vunpack.c.l.b16 %v845
    %v944 = vunpack.c.h.b16 %v845
    %v945 = vunpack.c.l.b16 %v846
    %v946 = vunpack.c.h.b16 %v846
    %v947 = vunpack.c.l.b16 %v847
    %v948 = vunpack.c.h.b16 %v847
    %v949 = vunpack.c.l.b16 %v848
    %v950 = vunpack.c.h.b16 %v848
    %v951 = vunpack.c.l.b16 %v849
    %v952 = vunpack.c.h.b16 %v849
    %v953 = vunpack.c.l.b16 %v850
    %v954 = vunpack.c.h.b16 %v850
    %v955 = vunpack.c.l.b16 %v851
    %v956 = vunpack.c.h.b16 %v851
    %v957 = vunpack.c.l.b16 %v852
    %v958 = vunpack.c.h.b16 %v852
    %v959 = vunpack.c.l.b16 %v853
    %v960 = vunpack.c.h.b16 %v853
    %v961 = vunpack.c.l.b16 %v854
    %v962 = vunpack.c.h.b16 %v854
    %v963 = vpack.c.b16 %v901, %v899
    %v964 = vpack.c.b16 %v902, %v900
    %v965 = vpack.c.b16 %v905, %v903
    %v966 = vpack.c.b16 %v906, %v904
    %v967 = vpack.c.b16 %v909, %v907
    %v968 = vpack.c.b16 %v910, %v908
    %v969 = vpack.c.b16 %v913, %v911
    %v970 = vpack.c.b16 %v914, %v912
    %v971 = vpack.c.b16 %v917, %v915
    %v972 = vpack.c.b16 %v918, %v916
    %v973 = vpack.c.b16 %v921, %v919
    %v974 = vpack.c.b16 %v922, %v920
    %v975 = vpack.c.b16 %v925, %v923
    %v976 = vpack.c.b16 %v926, %v924
    %v977 = vpack.c.b16 %v929, %v927
    %v978 = vpack.c.b16 %v930, %v928
    %v979 = vpack.c.b16 %v933, %v931
    %v980 = vpack.c.b16 %v934, %v932
    %v981 = vpack.c.b16 %v937, %v935
    %v982 = vpack.c.b16 %v938, %v936
    %v983 = vpack.c.b16 %v941, %v939
    %v984 = vpack.c.b16 %v942, %v940
    %v985 = vpack.c.b16 %v945, %v943
    %v986 = vpack.c.b16 %v946, %v944
    %v987 = vpack.c.b16 %v949, %v947
    %v988 = vpack.c.b16 %v950, %v948
    %v989 = vpack.c.b16 %v953, %v951
    %v990 = vpack.c.b16 %v954, %v952
    %v991 = vpack.c.b16 %v957, %v955
    %v992 = vpack.c.b16 %v958, %v956
    %v993 = vpack.c.b16 %v961, %v959
    %v994 = vpack.c.b16 %v962, %v960
    %1027 = vmatprep.subr.bf16.mxu0 %v978
    %1028 = vmatpush1.bf16.msra.mxu0 %v977
    %1029 = vmatprep.subr.bf16.mxu0 %v976
    %1030 = vmatpush1.bf16.msra.mxu0 %v975
    %1031 = vmatprep.subr.bf16.mxu0 %v974
    %1032 = vmatpush1.bf16.msra.mxu0 %v973
    %1033 = vmatprep.subr.bf16.mxu0 %v972
    %1034 = vmatpush1.bf16.msra.mxu0 %v971
    %1035 = vmatprep.subr.bf16.mxu0 %v970
    %1036 = vmatpush1.bf16.msra.mxu0 %v969
    %1037 = vmatprep.subr.bf16.mxu0 %v968
    %1038 = vmatpush1.bf16.msra.mxu0 %v967
    %1039 = vmatprep.subr.bf16.mxu0 %v966
    %1040 = vmatpush1.bf16.msra.mxu0 %v965
    %1041 = vmatprep.subr.bf16.mxu0 %v964
    %1042 = vmatpush1.bf16.msra.mxu0 %v963
    %1043 = vmatprep.subr.bf16.mxu0 %v994
    %1044 = vmatpush2.bf16.msra.mxu0 %v993
    %1045 = vmatprep.subr.bf16.mxu0 %v992
    %1046 = vmatpush2.bf16.msra.mxu0 %v991
    %1047 = vmatprep.subr.bf16.mxu0 %v990
    %1048 = vmatpush2.bf16.msra.mxu0 %v989
    %1049 = vmatprep.subr.bf16.mxu0 %v988
    %1050 = vmatpush2.bf16.msra.mxu0 %v987
    %1051 = vmatprep.subr.bf16.mxu0 %v986
    %1052 = vmatpush2.bf16.msra.mxu0 %v985
    %1053 = vmatprep.subr.bf16.mxu0 %v984
    %1054 = vmatpush2.bf16.msra.mxu0 %v983
    %1055 = vmatprep.subr.bf16.mxu0 %v982
    %1056 = vmatpush2.bf16.msra.mxu0 %v981
    %1057 = vmatprep.subr.bf16.mxu0 %v980
    %1058 = vmatpush2.bf16.msra.mxu0 %v979
    %1059 = vmatprep.mubr.bf16.mxu0 %v822
    %1060 = vmatmul.mubr.bf16.gmra.mxu0 %v821
    %v1061 = vpop.f32.mrf.mxu0
    %v1062 = vadd.f32 %v860, %v1061
    %v1063 = vpop.f32.mrf.mxu0
    %v1064 = vadd.f32 %v864, %v1063
    %v1065 = vpop.f32.mrf.mxu0
    %v1066 = vadd.f32 %v860, %v1065
    %v1067 = vpop.f32.mrf.mxu0
    %v1068 = vadd.f32 %v864, %v1067
    %1069 = vdwg.mxu0
    %v1070 = vmax.f32 %v1062, 0.0
    %v1071 = vmax.f32 %v1064, 0.0
    %v1072 = vmax.f32 %v1066, 0.0
    %v1073 = vmax.f32 %v1068, 0.0
    %v1074 = vpack.c.bf16 %v1072, %v1070
    %v1075 = vpack.c.bf16 %v1073, %v1071
    %v1076 = vld [vmem:[%s13] sm:$0xf]
    %v1077 = vld [vmem:[%s13 + $0x4] sm:$0xf]
    %v1078 = vld [vmem:[%s13 + $0x8] sm:$0xf]
    %v1079 = vld [vmem:[%s13 + $0xc] sm:$0xf]
    %v1080 = vld [vmem:[%s13 + $0x10] sm:$0xf]
    %v1081 = vld [vmem:[%s13 + $0x14] sm:$0xf]
    %v1082 = vld [vmem:[%s13 + $0x18] sm:$0xf]
    %v1083 = vld [vmem:[%s13 + $0x1c] sm:$0xf]
    %v1084 = vld [vmem:[%s13 + $0x20] sm:$0xf]
    %v1085 = vld [vmem:[%s13 + $0x24] sm:$0xf]
    %v1086 = vld [vmem:[%s13 + $0x28] sm:$0xf]
    %v1087 = vld [vmem:[%s13 + $0x2c] sm:$0xf]
    %v1088 = vld [vmem:[%s13 + $0x30] sm:$0xf]
    %v1089 = vld [vmem:[%s13 + $0x34] sm:$0xf]
    %v1090 = vld [vmem:[%s13 + $0x38] sm:$0xf]
    %v1091 = vld [vmem:[%s13 + $0x3c] sm:$0xf]
    %v1092 = vld [vmem:[%s13 + $0x40] sm:$0xf]
    %v1093 = vld [vmem:[%s13 + $0x44] sm:$0xf]
    %v1094 = vld [vmem:[%s13 + $0x48] sm:$0xf]
    %v1095 = vld [vmem:[%s13 + $0x4c] sm:$0xf]
    %v1096 = vld [vmem:[%s13 + $0x50] sm:$0xf]
    %v1097 = vld [vmem:[%s13 + $0x54] sm:$0xf]
    %v1098 = vld [vmem:[%s13 + $0x58] sm:$0xf]
    %v1099 = vld [vmem:[%s13 + $0x5c] sm:$0xf]
    %v1100 = vld [vmem:[%s13 + $0x60] sm:$0xf]
    %v1101 = vld [vmem:[%s13 + $0x64] sm:$0xf]
    %v1102 = vld [vmem:[%s13 + $0x68] sm:$0xf]
    %v1103 = vld [vmem:[%s13 + $0x6c] sm:$0xf]
    %v1104 = vld [vmem:[%s13 + $0x70] sm:$0xf]
    %v1105 = vld [vmem:[%s13 + $0x74] sm:$0xf]
    %v1106 = vld [vmem:[%s13 + $0x78] sm:$0xf]
    %v1107 = vld [vmem:[%s13 + $0x7c] sm:$0xf]
    %v1108 = vld [vmem:[%s14] sm:$0x1]
    %v1110 = vlaneseq
    %v1111 = vshrl.u32 %v1110, 7
    %v1112 = vsub.s32 0, %v1111
    %v1113 = vrot.slane %v1108, %v1112
    %v1147 = vunpack.c.l.b16 %v1076
    %v1148 = vunpack.c.l.b16 %v1077
    %v1149 = vunpack.c.l.b16 %v1078
    %v1150 = vunpack.c.l.b16 %v1079
    %v1151 = vunpack.c.l.b16 %v1080
    %v1152 = vunpack.c.l.b16 %v1081
    %v1153 = vunpack.c.l.b16 %v1082
    %v1154 = vunpack.c.l.b16 %v1083
    %v1155 = vunpack.c.l.b16 %v1084
    %v1156 = vunpack.c.l.b16 %v1085
    %v1157 = vunpack.c.l.b16 %v1086
    %v1158 = vunpack.c.l.b16 %v1087
    %v1159 = vunpack.c.l.b16 %v1088
    %v1160 = vunpack.c.l.b16 %v1089
    %v1161 = vunpack.c.l.b16 %v1090
    %v1162 = vunpack.c.l.b16 %v1091
    %v1163 = vunpack.c.l.b16 %v1092
    %v1164 = vunpack.c.l.b16 %v1093
    %v1165 = vunpack.c.l.b16 %v1094
    %v1166 = vunpack.c.l.b16 %v1095
    %v1167 = vunpack.c.l.b16 %v1096
    %v1168 = vunpack.c.l.b16 %v1097
    %v1169 = vunpack.c.l.b16 %v1098
    %v1170 = vunpack.c.l.b16 %v1099
    %v1171 = vunpack.c.l.b16 %v1100
    %v1172 = vunpack.c.l.b16 %v1101
    %v1173 = vunpack.c.l.b16 %v1102
    %v1174 = vunpack.c.l.b16 %v1103
    %v1175 = vunpack.c.l.b16 %v1104
    %v1176 = vunpack.c.l.b16 %v1105
    %v1177 = vunpack.c.l.b16 %v1106
    %v1178 = vunpack.c.l.b16 %v1107
    %v1179 = vpack.c.b16 %v1148, %v1147
    %v1180 = vpack.c.b16 %v1150, %v1149
    %v1181 = vpack.c.b16 %v1152, %v1151
    %v1182 = vpack.c.b16 %v1154, %v1153
    %v1183 = vpack.c.b16 %v1156, %v1155
    %v1184 = vpack.c.b16 %v1158, %v1157
    %v1185 = vpack.c.b16 %v1160, %v1159
    %v1186 = vpack.c.b16 %v1162, %v1161
    %v1187 = vpack.c.b16 %v1164, %v1163
    %v1188 = vpack.c.b16 %v1166, %v1165
    %v1189 = vpack.c.b16 %v1168, %v1167
    %v1190 = vpack.c.b16 %v1170, %v1169
    %v1191 = vpack.c.b16 %v1172, %v1171
    %v1192 = vpack.c.b16 %v1174, %v1173
    %v1193 = vpack.c.b16 %v1176, %v1175
    %v1194 = vpack.c.b16 %v1178, %v1177
    %1211 = vmatprep.subr.bf16.mxu0 0
    %1212 = vmatpush1.bf16.msra.mxu0 %v1186
    %1213 = vmatprep.subr.bf16.mxu0 0
    %1214 = vmatpush1.bf16.msra.mxu0 %v1185
    %1215 = vmatprep.subr.bf16.mxu0 0
    %1216 = vmatpush1.bf16.msra.mxu0 %v1184
    %1217 = vmatprep.subr.bf16.mxu0 0
    %1218 = vmatpush1.bf16.msra.mxu0 %v1183
    %1219 = vmatprep.subr.bf16.mxu0 0
    %1220 = vmatpush1.bf16.msra.mxu0 %v1182
    %1221 = vmatprep.subr.bf16.mxu0 0
    %1222 = vmatpush1.bf16.msra.mxu0 %v1181
    %1223 = vmatprep.subr.bf16.mxu0 0
    %1224 = vmatpush1.bf16.msra.mxu0 %v1180
    %1225 = vmatprep.subr.bf16.mxu0 0
    %1226 = vmatpush1.bf16.msra.mxu0 %v1179
    %1227 = vmatprep.subr.bf16.mxu0 0
    %1228 = vmatpush2.bf16.msra.mxu0 %v1194
    %1229 = vmatprep.subr.bf16.mxu0 0
    %1230 = vmatpush2.bf16.msra.mxu0 %v1193
    %1231 = vmatprep.subr.bf16.mxu0 0
    %1232 = vmatpush2.bf16.msra.mxu0 %v1192
    %1233 = vmatprep.subr.bf16.mxu0 0
    %1234 = vmatpush2.bf16.msra.mxu0 %v1191
    %1235 = vmatprep.subr.bf16.mxu0 0
    %1236 = vmatpush2.bf16.msra.mxu0 %v1190
    %1237 = vmatprep.subr.bf16.mxu0 0
    %1238 = vmatpush2.bf16.msra.mxu0 %v1189
    %1239 = vmatprep.subr.bf16.mxu0 0
    %1240 = vmatpush2.bf16.msra.mxu0 %v1188
    %1241 = vmatprep.subr.bf16.mxu0 0
    %1242 = vmatpush2.bf16.msra.mxu0 %v1187
    %1243 = vmatprep.mubr.bf16.mxu0 %v1075
    %1244 = vmatmul.mubr.bf16.gmra.mxu0 %v1074
    %v1245 = vpop.f32.mrf.mxu0
    %v1246 = vadd.f32 %v1113, %v1245
    %v1247 = vpop.f32.mrf.mxu0
    %v1248 = vpop.f32.mrf.mxu0
    %v1249 = vadd.f32 %v1113, %v1248
    %v1250 = vpop.f32.mrf.mxu0
    %1251 = vdwg.mxu0
    %v1252 = vtanh.pop %v1246
    %v1253 = vtanh.pop %v1249
    %1256 = vrot.lane.b32.xlu0 %v639, 4
    %v1257 = vpop.permute.xlu0 %1256
    %1258 = vrot.lane.b32.xlu0 %v642, 4
    %v1259 = vpop.permute.xlu0 %1258
    %1264 = vrot.lane.b32.xlu0 %v650, 4
    %v1265 = vpop.permute.xlu0 %1264
    %1266 = vrot.lane.b32.xlu0 %v652, 4
    %v1267 = vpop.permute.xlu0 %1266
    %vm1270 = vcmask 31744
    %v1271 = vsel %vm1270, %v1252, %v1257
    %v1272 = vsel %vm1270, %v1253, %v1259
    %vm1273 = vcmask 97280
    %v1274 = vsel %vm1273, %v1271, %v1265
    %v1275 = vsel %vm1273, %v1272, %v1267
    %vm1276 = vcmask 162816
    %v1277 = vsel %vm1276, %v1274, 0.0
    %v1278 = vsel %vm1276, %v1275, 0.0
    %1279 = vst [vmem:[#allocation11] sm:$0xff] %v1277
    %1280 = vst [vmem:[#allocation11 + $0x8] sm:$0xff] %v1278
    // Predicated region
    $region82: #{tpu_custom_call.1} parent=1 // pred_check
      _
    $region83: #{tpu_custom_call.1} parent=1 // pred_check_branch
      %1282 = sbr.rel (0) target = $region85
    $region84: #{tpu_custom_call.1} parent=1 // pred_region
      %s1284 = ssub.s32 256, 256
      %1285 = vsyncadd [#allocation4], %s1284
      %s1286 = sshll.u32 [#allocation11], 4
      %s1287 = int_to_ptr.vmem [resolvable:$true] %s1286
      %1292 = dma.vmem_to_hbm [thread:$0]  %s1287, 256, %s15, [#allocation4], 128, 128, 8
    $region85: #{tpu_custom_call.1} parent=1 // pred_fallthru
      _
    // Predicated region
    $region86: #{tpu_custom_call.1} parent=1 // pred_check
      _
    $region87: #{tpu_custom_call.1} parent=1 // pred_check_branch
      %1294 = sbr.rel (0) target = $region89
    $region88: #{tpu_custom_call.1} parent=1 // pred_region
      %1295 = dma.done [#allocation4], 256
    $region89: #{tpu_custom_call.1} parent=1 // pred_fallthru
      _
    %1296 = vsyncpa [#allocation3], 1
    %1297 = vsyncpa [#allocation6], 1
    %1298 = vsyncpa [#allocation9], 1
    %1299 = vsyncpa [#allocation4], 1

</llo_original>
